<compile_context>
chip_gen: v7x
topology: tpu7x:2x2x1
jax: 0.10.0
libtpu: 0.0.40
codegen_flags: <defaults>
</compile_context>

<pallas_src>
import math

import jax
import jax.numpy as jnp
from jax import lax
from jax.experimental import pallas as pl
from jax.experimental.pallas import tpu as pltpu


def _round_up(x, m):
    return (x + m - 1) // m * m


def _cdiv(a, b):
    return -(-a // b)


# ----------------------------------------------------------------------------
# Fused Pallas kernel: encoder (L x Linear+tanh) + tied decoder (L x Linear+tanh)
# ----------------------------------------------------------------------------
def _make_fused_kernel(num_layers, pf, tb, n_sub):
    """pf[j] = lane-padded width of feature dim j (pf[0] = padded input_size).
    The batch tile is statically unrolled over n_sub independent sub-tiles so
    one sub-tile's tanh (EUP) can co-issue with the other's matmul (MXU)."""
    L = num_layers
    hsz = tb // n_sub

    def kernel(*refs):
        # refs = [x, w_0..w_{L-1}, bias_stack, out]
        x_ref = refs[0]
        w_refs = refs[1:1 + L]          # bf16; w_refs[j]: (pf[j], pf[j+1])
        b_ref = refs[1 + L]             # f32 stacked biases: (rows_pad, pf_max)
        o_ref = refs[2 + L]

        for s in range(n_sub):
            r0 = s * hsz
            h = x_ref[r0:r0 + hsz, :]                     # bf16 (hsz, pf[0])
            # Encoder: tanh(h @ W_j + b_j)   (W_j stored as [Fin, Fout])
            for j in range(L):
                y = jnp.dot(h, w_refs[j][...],
                            preferred_element_type=jnp.float32)
                y = y + b_ref[j:j + 1, :pf[j + 1]]
                h = jnp.tanh(y).astype(jnp.bfloat16)
            # Tied decoder: tanh(h @ W_j^T + b). Transpose folded into
            # dot_general (contract dim 1 of both operands).
            # TODO(synk): verified pattern matches the q@k^T contraction Mosaic
            # drives natively on the MXU; re-check with pl.lower_as_mlir for
            # vxpose if layer widths grow large.
            for k in range(L):
                j = L - 1 - k
                y = lax.dot_general(
                    h, w_refs[j][...],
                    dimension_numbers=(((1,), (1,)), ((), ())),
                    preferred_element_type=jnp.float32)
                y = y + b_ref[L + k:L + k + 1, :pf[j]]
                a = jnp.tanh(y)
                h = a.astype(jnp.bfloat16) if k < L - 1 else a
            o_ref[r0:r0 + hsz, :] = h.astype(o_ref.dtype)

    return kernel


def autoencoder_forward(x, enc_w, enc_b, dec_b, *, block_b=128):
    """Forward pass matching Autoencoder.forward (default config) using one
    fused Pallas kernel. enc_w[j] is stored as (Fin, Fout) = W_pytorch^T."""
    B, input_size = x.shape
    L = len(enc_w)
    out_dt = x.dtype
    cdt = jnp.bfloat16                     # MXU operand dtype (f32 accumulate)

    # Per-layer lane-dense padding.
    feat = [input_size] + [int(w.shape[1]) for w in enc_w]
    pf = [_round_up(d, 128) for d in feat]
    pf_max = max(pf)

    # Batch tiling with minimal padding; >=2 grid steps once B > block_b.
    nb = max(1, _cdiv(B, block_b))
    tb = _round_up(_cdiv(B, nb), 8)
    b_pad = tb * nb
    n_sub = 2 if (tb >= 16 and tb % 16 == 0) else 1

    # Padded operands. Zero padding is exact: padded weight rows/cols and bias
    # lanes are 0, so padded activation lanes stay 0 (tanh(0)=0) end to end.
    xp = jnp.zeros((b_pad, pf[0]), cdt).at[:B, :input_size].set(x.astype(cdt))
    wps = [jnp.zeros((pf[j], pf[j + 1]), cdt)
              .at[:enc_w[j].shape[0], :enc_w[j].shape[1]]
              .set(enc_w[j].astype(cdt)) for j in range(L)]
    rows = _round_up(2 * L, 8)
    bstack = jnp.zeros((rows, pf_max), jnp.float32)
    for j in range(L):
        bstack = bstack.at[j, :enc_b[j].shape[0]].set(enc_b[j].astype(jnp.float32))
    for k in range(L):
        bstack = bstack.at[L + k, :dec_b[k].shape[0]].set(dec_b[k].astype(jnp.float32))

    in_specs = [pl.BlockSpec((tb, pf[0]), lambda i: (i, 0))]
    in_specs += [pl.BlockSpec((pf[j], pf[j + 1]), lambda i: (0, 0))
                 for j in range(L)]
    in_specs += [pl.BlockSpec((rows, pf_max), lambda i: (0, 0))]
    out_specs = pl.BlockSpec((tb, pf[0]), lambda i: (i, 0))

    # VMEM budget: weights + biases (conservatively 2x for default double
    # buffering), x/out tiles (2x), headroom for f32 intermediates. Clamp to
    # v7x's 64 MiB physical VMEM.
    # TODO(synk): single-buffer the constant weight/bias blocks
    # (pipeline_mode=pl.Buffered(1)) and K-tile any layer whose padded weight
    # alone exceeds this budget.
    w_bytes = sum(pf[j] * pf[j + 1] for j in range(L)) * 2
    b_bytes = rows * pf_max * 4
    io_bytes = 2 * tb * pf[0] * (2 + jnp.dtype(out_dt).itemsize)
    vmem_est = 2 * (w_bytes + b_bytes) + io_bytes + 6 * tb * pf_max * 4
    vmem_limit = int(min(max(2 * vmem_est, 32 * 1024 * 1024), 64 * 1024 * 1024))

    flops = sum(2 * 2 * b_pad * pf[j] * pf[j + 1] for j in range(L))
    transc = b_pad * (sum(pf[j + 1] for j in range(L))
                      + sum(pf[j] for j in range(L)))
    bytes_acc = (b_pad * pf[0] * 2 + w_bytes + b_bytes
                 + b_pad * pf[0] * jnp.dtype(out_dt).itemsize)

    out_p = pl.pallas_call(
        _make_fused_kernel(L, tuple(pf), tb, n_sub),
        out_shape=jax.ShapeDtypeStruct((b_pad, pf[0]), out_dt),
        grid_spec=pltpu.PrefetchScalarGridSpec(
            num_scalar_prefetch=0,
            grid=(nb,),
            in_specs=in_specs,
            out_specs=out_specs,
        ),
        compiler_params=pltpu.CompilerParams(
            dimension_semantics=("parallel",),
            vmem_limit_bytes=vmem_limit,
        ),
        cost_estimate=pl.CostEstimate(
            flops=int(flops),
            transcendentals=int(transc),
            bytes_accessed=int(bytes_acc),
        ),
    )(xp, *wps, bstack)

    return out_p[:B, :input_size]


# ----------------------------------------------------------------------------
# Parameter construction (deterministic, mimics nn.Linear's uniform init)
# ----------------------------------------------------------------------------
def init_autoencoder_params(key, input_size, layer_sizes):
    """Encoder weights stored as (Fin, Fout) matrices (i.e. W_pytorch^T),
    encoder biases, decoder biases. Decoder weights are tied (transposes of
    encoder weights) so they are not stored separately."""
    enc_w, enc_b, dec_b = [], [], []
    prev = input_size
    for size in layer_sizes:
        key, k1, k2 = jax.random.split(key, 3)
        bound = 1.0 / math.sqrt(prev)
        enc_w.append(jax.random.uniform(k1, (prev, size), jnp.float32, -bound, bound))
        enc_b.append(jax.random.uniform(k2, (size,), jnp.float32, -bound, bound))
        prev = size
    # Decoder layer k undoes encoder layer (L-1-k): Linear(size_j -> prev_j).
    for j in reversed(range(len(layer_sizes))):
        key, k3 = jax.random.split(key)
        fin_dec = layer_sizes[j]           # decoder input dim
        fout_dec = enc_w[j].shape[0]       # decoder output dim
        bound = 1.0 / math.sqrt(fin_dec)
        dec_b.append(jax.random.uniform(k3, (fout_dec,), jnp.float32, -bound, bound))
    return enc_w, enc_b, dec_b


# TODO(synk): dropout (p>0) and BatchNorm1d branches of __init__ are not exercised
# by the default config (dropout=0.0, batch_norm=False) and are omitted.


if __name__ == "__main__":
    key = jax.random.PRNGKey(0)

    B = 8
    input_size = 32
    layer_sizes = [16, 8]

    key, kx, kp = jax.random.split(key, 3)
    x = jax.random.normal(kx, (B, input_size), jnp.float32)

    enc_w, enc_b, dec_b = init_autoencoder_params(kp, input_size, layer_sizes)

    fwd = jax.jit(autoencoder_forward)
    out = jax.block_until_ready(fwd(x, enc_w, enc_b, dec_b))
    assert out.shape == (B, input_size)

    # Reference 1: mirrors the kernel's bf16-operand / f32-accumulate arithmetic.
    def ref_bf16(x, enc_w, enc_b, dec_b):
        bf = jnp.bfloat16
        L = len(enc_w)
        h = x.astype(bf)
        for j in range(L):
            y = jnp.dot(h, enc_w[j].astype(bf), preferred_element_type=jnp.float32)
            h = jnp.tanh(y + enc_b[j]).astype(bf)
        for k in range(L):
            j = L - 1 - k
            y = jnp.dot(h, enc_w[j].astype(bf).T, preferred_element_type=jnp.float32)
            a = jnp.tanh(y + dec_b[k])
            h = a.astype(bf) if k < L - 1 else a
        return h

    ref_q = ref_bf16(x, enc_w, enc_b, dec_b)
    assert jnp.allclose(out, ref_q, atol=2e-3), "mismatch vs bf16-mirrored reference"

    # Reference 2: pure-f32 semantics of the PyTorch module (tied weights,
    # tanh on every layer). Looser tolerance because kernel uses bf16 operands.
    h = x
    for w, b in zip(enc_w, enc_b):
        h = jnp.tanh(h @ w + b)
    for k, j in enumerate(reversed(range(len(enc_w)))):
        h = jnp.tanh(h @ enc_w[j].T + dec_b[k])
    assert jnp.allclose(out, h, atol=5e-2), "mismatch vs f32 reference"

    print("KERNEL_OK")
</pallas_src>

<mosaic_0001>
module attributes {stable_mosaic.version = 11 : i64} {
  func.func @kernel(%arg0: i32, %arg1: memref<8x128xbf16, #tpu.memory_space<vmem>>, %arg2: memref<128x128xbf16, #tpu.memory_space<vmem>>, %arg3: memref<128x128xbf16, #tpu.memory_space<vmem>>, %arg4: memref<8x128xf32, #tpu.memory_space<vmem>>, %arg5: memref<8x128xf32, #tpu.memory_space<vmem>>) attributes {dimension_semantics = [#tpu.dimension_semantics<parallel>], iteration_bounds = array<i64: 1>, scalar_prefetch = 0 : i64, scratch_operands = 0 : i64, tpu.core_type = #tpu.core_type<tc>, window_params = [{transform_indices = @transform_0, window_bounds = array<i64: 8, 128>}, {pipeline_mode = #tpu.pipeline_mode<synchronous>, transform_indices = @transform_1, window_bounds = array<i64: 128, 128>}, {pipeline_mode = #tpu.pipeline_mode<synchronous>, transform_indices = @transform_2, window_bounds = array<i64: 128, 128>}, {pipeline_mode = #tpu.pipeline_mode<synchronous>, transform_indices = @transform_3, window_bounds = array<i64: 8, 128>}, {transform_indices = @transform_4, window_bounds = array<i64: 8, 128>}]} {
    %c0 = arith.constant 0 : index
    %c0_0 = arith.constant 0 : index
    %0 = vector.load %arg1[%c0, %c0_0] : memref<8x128xbf16, #tpu.memory_space<vmem>>, vector<8x128xbf16>
    %c0_1 = arith.constant 0 : index
    %c0_2 = arith.constant 0 : index
    %1 = vector.load %arg2[%c0_1, %c0_2] : memref<128x128xbf16, #tpu.memory_space<vmem>>, vector<128x128xbf16>
    %cst = arith.constant dense<0.000000e+00> : vector<8x128xf32>
    %2 = tpu.matmul %0, %1, %cst {dimension_numbers = #tpu.dot_dimension_numbers<[1], [0], [0], [1], [0, 0, 1, 1], [], []>} : vector<8x128xbf16>, vector<128x128xbf16>, vector<8x128xf32> -> vector<8x128xf32>
    %c0_3 = arith.constant 0 : index
    %c0_4 = arith.constant 0 : index
    %3 = vector.load %arg4[%c0_3, %c0_4] : memref<8x128xf32, #tpu.memory_space<vmem>>, vector<1x128xf32>
    %4 = vector.broadcast %3 : vector<1x128xf32> to vector<8x128xf32>
    %5 = arith.addf %2, %4 : vector<8x128xf32>
    %6 = math.tanh %5 : vector<8x128xf32>
    %7 = arith.truncf %6 : vector<8x128xf32> to vector<8x128xbf16>
    %c0_5 = arith.constant 0 : index
    %c0_6 = arith.constant 0 : index
    %8 = vector.load %arg3[%c0_5, %c0_6] : memref<128x128xbf16, #tpu.memory_space<vmem>>, vector<128x128xbf16>
    %cst_7 = arith.constant dense<0.000000e+00> : vector<8x128xf32>
    %9 = tpu.matmul %7, %8, %cst_7 {dimension_numbers = #tpu.dot_dimension_numbers<[1], [0], [0], [1], [0, 0, 1, 1], [], []>} : vector<8x128xbf16>, vector<128x128xbf16>, vector<8x128xf32> -> vector<8x128xf32>
    %c1 = arith.constant 1 : index
    %c0_8 = arith.constant 0 : index
    %10 = vector.load %arg4[%c1, %c0_8] : memref<8x128xf32, #tpu.memory_space<vmem>>, vector<1x128xf32>
    %11 = vector.broadcast %10 : vector<1x128xf32> to vector<8x128xf32>
    %12 = arith.addf %9, %11 : vector<8x128xf32>
    %13 = math.tanh %12 : vector<8x128xf32>
    %14 = arith.truncf %13 : vector<8x128xf32> to vector<8x128xbf16>
    %c0_9 = arith.constant 0 : index
    %c0_10 = arith.constant 0 : index
    %15 = vector.load %arg3[%c0_9, %c0_10] : memref<128x128xbf16, #tpu.memory_space<vmem>>, vector<128x128xbf16>
    %cst_11 = arith.constant dense<0.000000e+00> : vector<8x128xf32>
    %16 = tpu.matmul %14, %15, %cst_11 {dimension_numbers = #tpu.dot_dimension_numbers<[1], [1], [0], [0], [0, 0, 1, 0], [], []>} : vector<8x128xbf16>, vector<128x128xbf16>, vector<8x128xf32> -> vector<8x128xf32>
    %c2 = arith.constant 2 : index
    %c0_12 = arith.constant 0 : index
    %17 = vector.load %arg4[%c2, %c0_12] : memref<8x128xf32, #tpu.memory_space<vmem>>, vector<1x128xf32>
    %18 = vector.broadcast %17 : vector<1x128xf32> to vector<8x128xf32>
    %19 = arith.addf %16, %18 : vector<8x128xf32>
    %20 = math.tanh %19 : vector<8x128xf32>
    %21 = arith.truncf %20 : vector<8x128xf32> to vector<8x128xbf16>
    %c0_13 = arith.constant 0 : index
    %c0_14 = arith.constant 0 : index
    %22 = vector.load %arg2[%c0_13, %c0_14] : memref<128x128xbf16, #tpu.memory_space<vmem>>, vector<128x128xbf16>
    %cst_15 = arith.constant dense<0.000000e+00> : vector<8x128xf32>
    %23 = tpu.matmul %21, %22, %cst_15 {dimension_numbers = #tpu.dot_dimension_numbers<[1], [1], [0], [0], [0, 0, 1, 0], [], []>} : vector<8x128xbf16>, vector<128x128xbf16>, vector<8x128xf32> -> vector<8x128xf32>
    %c3 = arith.constant 3 : index
    %c0_16 = arith.constant 0 : index
    %24 = vector.load %arg4[%c3, %c0_16] : memref<8x128xf32, #tpu.memory_space<vmem>>, vector<1x128xf32>
    %25 = vector.broadcast %24 : vector<1x128xf32> to vector<8x128xf32>
    %26 = arith.addf %23, %25 : vector<8x128xf32>
    %27 = math.tanh %26 : vector<8x128xf32>
    %c0_17 = arith.constant 0 : index
    %c0_18 = arith.constant 0 : index
    %28 = vector.load %arg5[%c0_17, %c0_18] : memref<8x128xf32, #tpu.memory_space<vmem>>, vector<8x128xf32>
    tpu.vector_store %arg5[%c0_17, %c0_18], %27 {strides = array<i32>} : memref<8x128xf32, #tpu.memory_space<vmem>>, vector<8x128xf32>,
    return
  }
  func.func @transform_0(%arg0: i32) -> (i32, i32) {
    %c0_i32 = arith.constant 0 : i32
    %c0_i32_0 = arith.constant 0 : i32
    return %arg0, %c0_i32 : i32, i32
  }
  func.func @transform_1(%arg0: i32) -> (i32, i32) {
    %c0_i32 = arith.constant 0 : i32
    %c0_i32_0 = arith.constant 0 : i32
    %c0_i32_1 = arith.constant 0 : i32
    return %c0_i32, %c0_i32_0 : i32, i32
  }
  func.func @transform_2(%arg0: i32) -> (i32, i32) {
    %c0_i32 = arith.constant 0 : i32
    %c0_i32_0 = arith.constant 0 : i32
    %c0_i32_1 = arith.constant 0 : i32
    return %c0_i32, %c0_i32_0 : i32, i32
  }
  func.func @transform_3(%arg0: i32) -> (i32, i32) {
    %c0_i32 = arith.constant 0 : i32
    %c0_i32_0 = arith.constant 0 : i32
    %c0_i32_1 = arith.constant 0 : i32
    return %c0_i32, %c0_i32_0 : i32, i32
  }
  func.func @transform_4(%arg0: i32) -> (i32, i32) {
    %c0_i32 = arith.constant 0 : i32
    %c0_i32_0 = arith.constant 0 : i32
    return %arg0, %c0_i32 : i32, i32
  }
}

</mosaic_0001>

<llo_original>
// kernel: autoencoder_forward.1
$region0: #{autoencoder_forward.1}
  #allocation0 [shape = 'u32[]', space=smem, size = 0x4, offset = 0x4, fixed_abs, tag = 'smem constant byte address 0x4 - core index']
  #allocation1 [shape = 'u32[144,128]{1,0:T(1,128)}', space=vmem, size = 0x12000, scoped, tag = 'internal scratch']
  %s0 = inlined_call_operand.vmem [shape: bf16[8,128], index: 0, kind: input, shape index: {}]
  %s1 = inlined_call_operand.vmem [shape: bf16[128,128], index: 1, kind: input, shape index: {}]
  %s2 = inlined_call_operand.vmem [shape: bf16[128,128], index: 2, kind: input, shape index: {}]
  %s3 = inlined_call_operand.vmem [shape: f32[8,128], index: 3, kind: input, shape index: {}]
  %s4 = inlined_call_operand.hbm [shape: f32[8,128], index: 4, kind: output, shape index: {}]
  %s5 = sld [smem:[#allocation0]]
  $region26: #{autoencoder_forward.1} parent=0
    _
  %s7 = ssub.s32 1, %s5
  %s8 = scalar_select 0, %s7, %s5
  $region1: #{autoencoder_forward.1} parent=0
    #allocation2 [shape = 'u8[4096]{0}', space=vmem, size = 0x1000, scoped, tag = 'output window, operand 0, single buffered']
    #allocation3 [shape = 's32[1]{0}', space=sflag, size = 0x4, scoped, tag = 'scoped memory for autoencoder_forward.1']
    %9 = vsyncpa [#allocation3], 0
    // Predicated region
    $region2: #{autoencoder_forward.1} parent=1 // pred_check
      _
    $region3: #{autoencoder_forward.1} parent=1 // pred_check_branch
      %11 = sbr.rel (0) target = $region5
    $region4: #{autoencoder_forward.1} parent=1 // pred_region
      _
    $region5: #{autoencoder_forward.1} parent=1 // pred_fallthru
      _
    // Predicated region
    $region6: #{autoencoder_forward.1} parent=1 // pred_check
      _
    $region7: #{autoencoder_forward.1} parent=1 // pred_check_branch
      %13 = sbr.rel (0) target = $region9
    $region8: #{autoencoder_forward.1} parent=1 // pred_region
      _
    $region9: #{autoencoder_forward.1} parent=1 // pred_fallthru
      _
    // Predicated region
    $region10: #{autoencoder_forward.1} parent=1 // pred_check
      _
    $region11: #{autoencoder_forward.1} parent=1 // pred_check_branch
      %15 = sbr.rel (0) target = $region13
    $region12: #{autoencoder_forward.1} parent=1 // pred_region
      _
    $region13: #{autoencoder_forward.1} parent=1 // pred_fallthru
      _
    // Predicated region
    $region14: #{autoencoder_forward.1} parent=1 // pred_check
      _
    $region15: #{autoencoder_forward.1} parent=1 // pred_check_branch
      %17 = sbr.rel (0) target = $region17
    $region16: #{autoencoder_forward.1} parent=1 // pred_region
      _
    $region17: #{autoencoder_forward.1} parent=1 // pred_fallthru
      _
    %v19 = vld [vmem:[%s0] sm:$0xf]
    %v20 = vld [vmem:[%s1] sm:$0xf]
    %v21 = vld [vmem:[%s1 + $0x4] sm:$0xf]
    %v22 = vld [vmem:[%s1 + $0x8] sm:$0xf]
    %v23 = vld [vmem:[%s1 + $0xc] sm:$0xf]
    %v24 = vld [vmem:[%s1 + $0x10] sm:$0xf]
    %v25 = vld [vmem:[%s1 + $0x14] sm:$0xf]
    %v26 = vld [vmem:[%s1 + $0x18] sm:$0xf]
    %v27 = vld [vmem:[%s1 + $0x1c] sm:$0xf]
    %v28 = vld [vmem:[%s1 + $0x20] sm:$0xf]
    %v29 = vld [vmem:[%s1 + $0x24] sm:$0xf]
    %v30 = vld [vmem:[%s1 + $0x28] sm:$0xf]
    %v31 = vld [vmem:[%s1 + $0x2c] sm:$0xf]
    %v32 = vld [vmem:[%s1 + $0x30] sm:$0xf]
    %v33 = vld [vmem:[%s1 + $0x34] sm:$0xf]
    %v34 = vld [vmem:[%s1 + $0x38] sm:$0xf]
    %v35 = vld [vmem:[%s1 + $0x3c] sm:$0xf]
    %v36 = vld [vmem:[%s3] sm:$0x1]
    %v37 = vlaneseq
    %v38 = vshrl.u32 %v37, 7
    %v39 = vsub.s32 0, %v38
    %v40 = vrot.slane %v36, %v39
    %v57 = vunpack.c.l.b16 %v20
    %v58 = vunpack.c.l.b16 %v21
    %v59 = vunpack.c.l.b16 %v22
    %v60 = vunpack.c.l.b16 %v23
    %v61 = vunpack.c.l.b16 %v24
    %v62 = vunpack.c.l.b16 %v25
    %v63 = vunpack.c.l.b16 %v26
    %v64 = vunpack.c.l.b16 %v27
    %v65 = vunpack.c.l.b16 %v28
    %v66 = vunpack.c.l.b16 %v29
    %v67 = vunpack.c.l.b16 %v30
    %v68 = vunpack.c.l.b16 %v31
    %v69 = vunpack.c.l.b16 %v32
    %v70 = vunpack.c.l.b16 %v33
    %v71 = vunpack.c.l.b16 %v34
    %v72 = vunpack.c.l.b16 %v35
    %v73 = vpack.c.b16 %v58, %v57
    %v74 = vpack.c.b16 %v60, %v59
    %v75 = vpack.c.b16 %v62, %v61
    %v76 = vpack.c.b16 %v64, %v63
    %v77 = vpack.c.b16 %v66, %v65
    %v78 = vpack.c.b16 %v68, %v67
    %v79 = vpack.c.b16 %v70, %v69
    %v80 = vpack.c.b16 %v72, %v71
    %89 = vmatprep.subr.bf16.mxu0 0
    %90 = vmatpush1.bf16.msra.mxu0 %v73
    %91 = vmatprep.subr.bf16.mxu0 0
    %92 = vmatpush1.bf16.msra.mxu0 %v74
    %93 = vmatprep.subr.bf16.mxu0 0
    %94 = vmatpush1.bf16.msra.mxu0 %v75
    %95 = vmatprep.subr.bf16.mxu0 0
    %96 = vmatpush1.bf16.msra.mxu0 %v76
    %97 = vmatprep.subr.bf16.mxu0 0
    %98 = vmatpush1.bf16.msra.mxu0 %v77
    %99 = vmatprep.subr.bf16.mxu0 0
    %100 = vmatpush1.bf16.msra.mxu0 %v78
    %101 = vmatprep.subr.bf16.mxu0 0
    %102 = vmatpush1.bf16.msra.mxu0 %v79
    %103 = vmatprep.subr.bf16.mxu0 0
    %104 = vmatpush1.bf16.msra.mxu0 %v80
    %105 = vmatprep.subr.bf16.mxu0 0
    %106 = vmatpush1.bf16.msra.mxu0 0
    %107 = vmatprep.subr.bf16.mxu0 0
    %108 = vmatpush1.bf16.msra.mxu0 0
    %109 = vmatprep.subr.bf16.mxu0 0
    %110 = vmatpush1.bf16.msra.mxu0 0
    %111 = vmatprep.subr.bf16.mxu0 0
    %112 = vmatpush1.bf16.msra.mxu0 0
    %113 = vmatprep.subr.bf16.mxu0 0
    %114 = vmatpush1.bf16.msra.mxu0 0
    %115 = vmatprep.subr.bf16.mxu0 0
    %116 = vmatpush1.bf16.msra.mxu0 0
    %117 = vmatprep.subr.bf16.mxu0 0
    %118 = vmatpush1.bf16.msra.mxu0 0
    %119 = vmatprep.subr.bf16.mxu0 0
    %120 = vmatpush1.bf16.msra.mxu0 0
    %121 = vmatprep.mubr.bf16.mxu0 0
    %122 = vmatmul.mubr.bf16.gmra.mrb[0].mxu0 %v19
    %v123 = vpop.f32.mrb[0].mxu0
    %v124 = vadd.f32 %v40, %v123
    %v125 = vpop.f32.mrb[0].mxu0
    %v126 = vpop.f32.mrb[0].mxu0
    %v127 = vpop.f32.mrb[0].mxu0
    %128 = vdwg.mxu0
    %v129 = vtanh.pop %v124
    %v130 = vpack.c.bf16 %v129, %v129
    %v131 = vld [vmem:[%s2] sm:$0xf]
    %v132 = vld [vmem:[%s2 + $0x4] sm:$0xf]
    %v133 = vld [vmem:[%s2 + $0x8] sm:$0xf]
    %v134 = vld [vmem:[%s2 + $0xc] sm:$0xf]
    %v135 = vld [vmem:[%s2 + $0x10] sm:$0xf]
    %v136 = vld [vmem:[%s2 + $0x14] sm:$0xf]
    %v137 = vld [vmem:[%s2 + $0x18] sm:$0xf]
    %v138 = vld [vmem:[%s2 + $0x1c] sm:$0xf]
    %v139 = vld [vmem:[%s2 + $0x20] sm:$0xf]
    %v140 = vld [vmem:[%s2 + $0x24] sm:$0xf]
    %v141 = vld [vmem:[%s2 + $0x28] sm:$0xf]
    %v142 = vld [vmem:[%s2 + $0x2c] sm:$0xf]
    %v143 = vld [vmem:[%s2 + $0x30] sm:$0xf]
    %v144 = vld [vmem:[%s2 + $0x34] sm:$0xf]
    %v145 = vld [vmem:[%s2 + $0x38] sm:$0xf]
    %v146 = vld [vmem:[%s2 + $0x3c] sm:$0xf]
    %v147 = vld [vmem:[%s3 + $0x1] sm:$0x1]
    %v148 = vlaneseq
    %v149 = vshrl.u32 %v148, 7
    %v150 = vsub.s32 0, %v149
    %v151 = vrot.slane %v147, %v150
    %v168 = vunpack.c.l.b16 %v131
    %v169 = vunpack.c.l.b16 %v132
    %v170 = vunpack.c.l.b16 %v133
    %v171 = vunpack.c.l.b16 %v134
    %v172 = vunpack.c.l.b16 %v135
    %v173 = vunpack.c.l.b16 %v136
    %v174 = vunpack.c.l.b16 %v137
    %v175 = vunpack.c.l.b16 %v138
    %v176 = vunpack.c.l.b16 %v139
    %v177 = vunpack.c.l.b16 %v140
    %v178 = vunpack.c.l.b16 %v141
    %v179 = vunpack.c.l.b16 %v142
    %v180 = vunpack.c.l.b16 %v143
    %v181 = vunpack.c.l.b16 %v144
    %v182 = vunpack.c.l.b16 %v145
    %v183 = vunpack.c.l.b16 %v146
    %v184 = vpack.c.b16 %v169, %v168
    %v185 = vpack.c.b16 %v171, %v170
    %v186 = vpack.c.b16 %v173, %v172
    %v187 = vpack.c.b16 %v175, %v174
    %v188 = vpack.c.b16 %v177, %v176
    %v189 = vpack.c.b16 %v179, %v178
    %v190 = vpack.c.b16 %v181, %v180
    %v191 = vpack.c.b16 %v183, %v182
    %200 = vmatprep.subr.bf16.mxu0 0
    %201 = vmatpush1.bf16.msra.mxu0 %v184
    %202 = vmatprep.subr.bf16.mxu0 0
    %203 = vmatpush1.bf16.msra.mxu0 %v185
    %204 = vmatprep.subr.bf16.mxu0 0
    %205 = vmatpush1.bf16.msra.mxu0 %v186
    %206 = vmatprep.subr.bf16.mxu0 0
    %207 = vmatpush1.bf16.msra.mxu0 %v187
    %208 = vmatprep.subr.bf16.mxu0 0
    %209 = vmatpush1.bf16.msra.mxu0 %v188
    %210 = vmatprep.subr.bf16.mxu0 0
    %211 = vmatpush1.bf16.msra.mxu0 %v189
    %212 = vmatprep.subr.bf16.mxu0 0
    %213 = vmatpush1.bf16.msra.mxu0 %v190
    %214 = vmatprep.subr.bf16.mxu0 0
    %215 = vmatpush1.bf16.msra.mxu0 %v191
    %216 = vmatprep.subr.bf16.mxu0 0
    %217 = vmatpush1.bf16.msra.mxu0 0
    %218 = vmatprep.subr.bf16.mxu0 0
    %219 = vmatpush1.bf16.msra.mxu0 0
    %220 = vmatprep.subr.bf16.mxu0 0
    %221 = vmatpush1.bf16.msra.mxu0 0
    %222 = vmatprep.subr.bf16.mxu0 0
    %223 = vmatpush1.bf16.msra.mxu0 0
    %224 = vmatprep.subr.bf16.mxu0 0
    %225 = vmatpush1.bf16.msra.mxu0 0
    %226 = vmatprep.subr.bf16.mxu0 0
    %227 = vmatpush1.bf16.msra.mxu0 0
    %228 = vmatprep.subr.bf16.mxu0 0
    %229 = vmatpush1.bf16.msra.mxu0 0
    %230 = vmatprep.subr.bf16.mxu0 0
    %231 = vmatpush1.bf16.msra.mxu0 0
    %232 = vmatprep.mubr.bf16.mxu0 0
    %233 = vmatmul.mubr.bf16.gmra.mrb[0].mxu0 %v130
    %v234 = vpop.f32.mrb[0].mxu0
    %v235 = vadd.f32 %v151, %v234
    %v236 = vpop.f32.mrb[0].mxu0
    %v237 = vpop.f32.mrb[0].mxu0
    %v238 = vpop.f32.mrb[0].mxu0
    %239 = vdwg.mxu0
    %v240 = vtanh.pop %v235
    %v241 = vpack.c.bf16 %v240, %v240
    %v242 = vld [vmem:[%s3 + $0x2] sm:$0x1]
    %v243 = vlaneseq
    %v244 = vshrl.u32 %v243, 7
    %v245 = vsub.s32 0, %v244
    %v246 = vrot.slane %v242, %v245
    %247 = vmatprep.subr.bf16.mxu0 0
    %248 = vmatpush1.bf16.xpose.msra.mxu0 %v184
    %249 = vmatprep.subr.bf16.mxu0 0
    %250 = vmatpush1.bf16.xpose.msra.mxu0 %v185
    %251 = vmatprep.subr.bf16.mxu0 0
    %252 = vmatpush1.bf16.xpose.msra.mxu0 %v186
    %253 = vmatprep.subr.bf16.mxu0 0
    %254 = vmatpush1.bf16.xpose.msra.mxu0 %v187
    %255 = vmatprep.subr.bf16.mxu0 0
    %256 = vmatpush1.bf16.xpose.msra.mxu0 %v188
    %257 = vmatprep.subr.bf16.mxu0 0
    %258 = vmatpush1.bf16.xpose.msra.mxu0 %v189
    %259 = vmatprep.subr.bf16.mxu0 0
    %260 = vmatpush1.bf16.xpose.msra.mxu0 %v190
    %261 = vmatprep.subr.bf16.mxu0 0
    %262 = vmatpush1.bf16.xpose.msra.mxu0 %v191
    %263 = vmatprep.subr.bf16.mxu0 0
    %264 = vmatpush1.bf16.xpose.msra.mxu0 0
    %265 = vmatprep.subr.bf16.mxu0 0
    %266 = vmatpush1.bf16.xpose.msra.mxu0 0
    %267 = vmatprep.subr.bf16.mxu0 0
    %268 = vmatpush1.bf16.xpose.msra.mxu0 0
    %269 = vmatprep.subr.bf16.mxu0 0
    %270 = vmatpush1.bf16.xpose.msra.mxu0 0
    %271 = vmatprep.subr.bf16.mxu0 0
    %272 = vmatpush1.bf16.xpose.msra.mxu0 0
    %273 = vmatprep.subr.bf16.mxu0 0
    %274 = vmatpush1.bf16.xpose.msra.mxu0 0
    %275 = vmatprep.subr.bf16.mxu0 0
    %276 = vmatpush1.bf16.xpose.msra.mxu0 0
    %277 = vmatprep.subr.bf16.mxu0 0
    %278 = vmatpush1.bf16.xpose.msra.mxu0 0
    %279 = vmatprep.mubr.bf16.mxu0 0
    %280 = vmatmul.mubr.bf16.gmra.mrb[0].mxu0 %v241
    %v281 = vpop.f32.mrb[0].mxu0
    %v282 = vadd.f32 %v246, %v281
    %v283 = vpop.f32.mrb[0].mxu0
    %v284 = vpop.f32.mrb[0].mxu0
    %v285 = vpop.f32.mrb[0].mxu0
    %286 = vdwg.mxu0
    %v287 = vtanh.pop %v282
    %v288 = vpack.c.bf16 %v287, %v287
    %v289 = vld [vmem:[%s3 + $0x3] sm:$0x1]
    %v290 = vlaneseq
    %v291 = vshrl.u32 %v290, 7
    %v292 = vsub.s32 0, %v291
    %v293 = vrot.slane %v289, %v292
    %294 = vmatprep.subr.bf16.mxu0 0
    %295 = vmatpush1.bf16.xpose.msra.mxu0 %v73
    %296 = vmatprep.subr.bf16.mxu0 0
    %297 = vmatpush1.bf16.xpose.msra.mxu0 %v74
    %298 = vmatprep.subr.bf16.mxu0 0
    %299 = vmatpush1.bf16.xpose.msra.mxu0 %v75
    %300 = vmatprep.subr.bf16.mxu0 0
    %301 = vmatpush1.bf16.xpose.msra.mxu0 %v76
    %302 = vmatprep.subr.bf16.mxu0 0
    %303 = vmatpush1.bf16.xpose.msra.mxu0 %v77
    %304 = vmatprep.subr.bf16.mxu0 0
    %305 = vmatpush1.bf16.xpose.msra.mxu0 %v78
    %306 = vmatprep.subr.bf16.mxu0 0
    %307 = vmatpush1.bf16.xpose.msra.mxu0 %v79
    %308 = vmatprep.subr.bf16.mxu0 0
    %309 = vmatpush1.bf16.xpose.msra.mxu0 %v80
    %310 = vmatprep.subr.bf16.mxu0 0
    %311 = vmatpush1.bf16.xpose.msra.mxu0 0
    %312 = vmatprep.subr.bf16.mxu0 0
    %313 = vmatpush1.bf16.xpose.msra.mxu0 0
    %314 = vmatprep.subr.bf16.mxu0 0
    %315 = vmatpush1.bf16.xpose.msra.mxu0 0
    %316 = vmatprep.subr.bf16.mxu0 0
    %317 = vmatpush1.bf16.xpose.msra.mxu0 0
    %318 = vmatprep.subr.bf16.mxu0 0
    %319 = vmatpush1.bf16.xpose.msra.mxu0 0
    %320 = vmatprep.subr.bf16.mxu0 0
    %321 = vmatpush1.bf16.xpose.msra.mxu0 0
    %322 = vmatprep.subr.bf16.mxu0 0
    %323 = vmatpush1.bf16.xpose.msra.mxu0 0
    %324 = vmatprep.subr.bf16.mxu0 0
    %325 = vmatpush1.bf16.xpose.msra.mxu0 0
    %326 = vmatprep.mubr.bf16.mxu0 0
    %327 = vmatmul.mubr.bf16.gmra.mrb[0].mxu0 %v288
    %v328 = vpop.f32.mrb[0].mxu0
    %v329 = vadd.f32 %v293, %v328
    %v330 = vpop.f32.mrb[0].mxu0
    %v331 = vpop.f32.mrb[0].mxu0
    %v332 = vpop.f32.mrb[0].mxu0
    %333 = vdwg.mxu0
    %v334 = vtanh.pop %v329
    %335 = vst [vmem:[#allocation2] sm:$0xff] %v334
    // Predicated region
    $region18: #{autoencoder_forward.1} parent=1 // pred_check
      _
    $region19: #{autoencoder_forward.1} parent=1 // pred_check_branch
      %337 = sbr.rel (0) target = $region21
    $region20: #{autoencoder_forward.1} parent=1 // pred_region
      %s339 = ssub.s32 128, 128
      %340 = vsyncadd [#allocation3], %s339
      %s342 = sshll.u32 [#allocation2], 4
      %s343 = int_to_ptr.vmem [resolvable:$true] %s342
      %345 = dma.vmem_to_hbm [thread:$0]  %s343, 128, %s4, [#allocation3]
    $region21: #{autoencoder_forward.1} parent=1 // pred_fallthru
      _
    // Predicated region
    $region22: #{autoencoder_forward.1} parent=1 // pred_check
      _
    $region23: #{autoencoder_forward.1} parent=1 // pred_check_branch
      %347 = sbr.rel (0) target = $region25
    $region24: #{autoencoder_forward.1} parent=1 // pred_region
      %348 = dma.done [#allocation3], 128
    $region25: #{autoencoder_forward.1} parent=1 // pred_fallthru
      _
    %349 = vsyncpa [#allocation3], 1

</llo_original>
